<compile_context>
chip_gen: v6e
topology: v6e:2x2x1
jax: 0.10.0
libtpu: 0.0.40
codegen_flags: <defaults>
</compile_context>

<pallas_src>
import functools
import math

import jax
import jax.numpy as jnp
from jax import lax
from jax.experimental import pallas as pl
from jax.experimental.pallas import tpu as pltpu


# ---------------------------------------------------------------------------
# Tiled matmul kernel (qkv_proj and o_proj).
# ---------------------------------------------------------------------------
def _matmul_kernel(x_ref, w_ref, o_ref, acc_ref):
    @pl.when(pl.program_id(2) == 0)
    def _():
        acc_ref[...] = jnp.zeros_like(acc_ref)

    acc_ref[...] += jnp.dot(x_ref[...], w_ref[...],
                            preferred_element_type=jnp.float32)

    @pl.when(pl.program_id(2) == pl.num_programs(2) - 1)
    def _():
        o_ref[...] = acc_ref[...].astype(o_ref.dtype)


def _pick_tile(dim, target):
    # Largest legal tile: either the whole axis (always legal) or `target`
    # when it divides the axis evenly.
    if dim <= target:
        return dim
    if dim % target == 0:
        return target
    return dim


def linear(x, w, *, tm=256, tn=256, tk=512):
    """x: (M, K), w: (K, N) -> x @ w, computed on the MXU."""
    M, K = x.shape
    K2, N = w.shape
    assert K == K2
    tm, tn, tk = _pick_tile(M, tm), _pick_tile(N, tn), _pick_tile(K, tk)
    grid = (M // tm, N // tn, K // tk)
    return pl.pallas_call(
        _matmul_kernel,
        out_shape=jax.ShapeDtypeStruct((M, N), x.dtype),
        grid_spec=pltpu.PrefetchScalarGridSpec(
            num_scalar_prefetch=0,
            grid=grid,
            in_specs=[
                pl.BlockSpec((tm, tk), lambda i, j, k: (i, k)),
                pl.BlockSpec((tk, tn), lambda i, j, k: (k, j)),
            ],
            out_specs=pl.BlockSpec((tm, tn), lambda i, j, k: (i, j)),
            scratch_shapes=[pltpu.VMEM((tm, tn), jnp.float32)],
        ),
        compiler_params=pltpu.CompilerParams(
            dimension_semantics=("parallel", "parallel", "arbitrary")),
    )(x, w)


# ---------------------------------------------------------------------------
# Fused RoPE + attention kernel: one (batch, q_head) tile per grid step.
# ---------------------------------------------------------------------------
def _rope_attn_kernel(pos_ref, inv_ref, q_ref, k_ref, v_ref, mask_ref, o_ref,
                      *, scale):
    # pos_ref : (1, S, 1)  f32   positions, sublane-major
    # inv_ref : (1, half)  f32   inverse frequencies (shared)
    # q/k/v   : (1, 1, S, D)
    # mask    : (1, 1, S, S)     additive mask (0 / -1e30)
    # o_ref   : (1, 1, S, D)
    pos = pos_ref[0].astype(jnp.float32)            # (S, 1)
    inv = inv_ref[...].astype(jnp.float32)          # (1, half)
    freqs = pos * inv                               # (S, half) -- lane broadcast
    cos_h = jnp.cos(freqs)                          # half-width only: no concat,
    sin_h = jnp.sin(freqs)                          # half the sin/cos work

    q = q_ref[0, 0].astype(jnp.float32)             # (S, D)
    k = k_ref[0, 0].astype(jnp.float32)             # (S, D)
    half = cos_h.shape[-1]
    q1, q2 = q[:, :half], q[:, half:]
    k1, k2 = k[:, :half], k[:, half:]
    # q*[c,c] + rotate_half(q)*[s,s]  ==  [q1*c - q2*s, q2*c + q1*s]
    q_rot = jnp.concatenate([q1 * cos_h - q2 * sin_h,
                             q2 * cos_h + q1 * sin_h], axis=-1)
    k_rot = jnp.concatenate([k1 * cos_h - k2 * sin_h,
                             k2 * cos_h + k1 * sin_h], axis=-1)

    # scores = (q k^T) * scale + mask   (contraction via dot_general, no transpose copy)
    scores = lax.dot_general(q_rot, k_rot, (((1,), (1,)), ((), ())),
                             preferred_element_type=jnp.float32) * scale
    scores = scores + mask_ref[0, 0].astype(jnp.float32)

    m = jnp.max(scores, axis=-1, keepdims=True)
    p = jnp.exp(scores - m)
    denom = jnp.sum(p, axis=-1, keepdims=True)
    probs = p / denom

    v = v_ref[0, 0].astype(jnp.float32)
    out = jnp.dot(probs, v, preferred_element_type=jnp.float32)
    o_ref[0, 0] = out.astype(o_ref.dtype)


def phi3_attention(hidden_states, position_ids, attention_mask,
                   w_qkv, w_o, inv_freq, num_heads, num_kv_heads):
    """Phi3Attention forward (eval mode, no KV cache).

    hidden_states : (B, S, H)
    position_ids  : (B, S) int
    attention_mask: (B, 1, S, S) additive mask
    w_qkv         : (op_size, H)   (torch nn.Linear layout)
    w_o           : (H, num_heads*head_dim)
    inv_freq      : (head_dim // 2,)
    """
    B, S, H = hidden_states.shape
    head_dim = H // num_heads
    n_rep = num_heads // num_kv_heads
    half = inv_freq.shape[0]
    dtype = hidden_states.dtype

    # --- qkv projection (Pallas MXU matmul) --------------------------------
    qkv = linear(hidden_states.reshape(B * S, H), w_qkv.T.astype(dtype))
    query_pos = num_heads * head_dim
    kv_size = num_kv_heads * head_dim
    q = qkv[:, :query_pos].reshape(B, S, num_heads, head_dim).transpose(0, 2, 1, 3)
    k = qkv[:, query_pos:query_pos + kv_size].reshape(
        B, S, num_kv_heads, head_dim).transpose(0, 2, 1, 3)
    v = qkv[:, query_pos + kv_size:].reshape(
        B, S, num_kv_heads, head_dim).transpose(0, 2, 1, 3)

    # --- fused RoPE + attention ---------------------------------------------
    pos = position_ids.astype(jnp.float32).reshape(B, S, 1)   # sublane-major
    inv2d = inv_freq.astype(jnp.float32).reshape(1, half)
    scale = 1.0 / math.sqrt(head_dim)

    kernel = functools.partial(_rope_attn_kernel, scale=scale)
    attn = pl.pallas_call(
        kernel,
        out_shape=jax.ShapeDtypeStruct((B, num_heads, S, head_dim), dtype),
        grid=(B, num_heads),
        in_specs=[
            pl.BlockSpec((1, S, 1), lambda b, h: (b, 0, 0)),
            pl.BlockSpec((1, half), lambda b, h: (0, 0)),
            pl.BlockSpec((1, 1, S, head_dim), lambda b, h: (b, h, 0, 0)),
            # GQA: repeat_kv realized purely through the index_map (h // n_rep).
            pl.BlockSpec((1, 1, S, head_dim), lambda b, h: (b, h // n_rep, 0, 0)),
            pl.BlockSpec((1, 1, S, head_dim), lambda b, h: (b, h // n_rep, 0, 0)),
            pl.BlockSpec((1, 1, S, S), lambda b, h: (b, 0, 0, 0)),
        ],
        out_specs=pl.BlockSpec((1, 1, S, head_dim), lambda b, h: (b, h, 0, 0)),
        compiler_params=pltpu.CompilerParams(
            dimension_semantics=("parallel", "parallel")),
    )(pos, inv2d, q, k, v, attention_mask)

    # --- output projection ---------------------------------------------------
    attn = attn.transpose(0, 2, 1, 3).reshape(B * S, num_heads * head_dim)
    out = linear(attn, w_o.T.astype(dtype))
    return out.reshape(B, S, H)


# ---------------------------------------------------------------------------
# Pure-JAX reference mirroring the PyTorch module (for verification).
# ---------------------------------------------------------------------------
def _rotate_half(x):
    half = x.shape[-1] // 2
    return jnp.concatenate([-x[..., half:], x[..., :half]], axis=-1)


def _reference(hidden_states, position_ids, attention_mask, w_qkv, w_o,
               inv_freq, num_heads, num_kv_heads):
    B, S, H = hidden_states.shape
    head_dim = H // num_heads
    n_rep = num_heads // num_kv_heads
    hp = jax.lax.Precision.HIGHEST

    qkv = jnp.matmul(hidden_states, w_qkv.T, precision=hp)
    query_pos = num_heads * head_dim
    kv_size = num_kv_heads * head_dim
    q = qkv[..., :query_pos].reshape(B, S, num_heads, head_dim).transpose(0, 2, 1, 3)
    k = qkv[..., query_pos:query_pos + kv_size].reshape(
        B, S, num_kv_heads, head_dim).transpose(0, 2, 1, 3)
    v = qkv[..., query_pos + kv_size:].reshape(
        B, S, num_kv_heads, head_dim).transpose(0, 2, 1, 3)

    freqs = (position_ids.astype(jnp.float32)[:, :, None]
             * inv_freq.astype(jnp.float32)[None, None, :])
    emb = jnp.concatenate([freqs, freqs], axis=-1)
    cos = jnp.cos(emb).astype(hidden_states.dtype)[:, None, :, :]
    sin = jnp.sin(emb).astype(hidden_states.dtype)[:, None, :, :]
    q = q * cos + _rotate_half(q) * sin
    k = k * cos + _rotate_half(k) * sin

    k = jnp.repeat(k, n_rep, axis=1)
    v = jnp.repeat(v, n_rep, axis=1)

    scores = jnp.matmul(q, k.transpose(0, 1, 3, 2), precision=hp) / math.sqrt(head_dim)
    scores = scores + attention_mask
    probs = jax.nn.softmax(scores.astype(jnp.float32), axis=-1).astype(v.dtype)
    out = jnp.matmul(probs, v, precision=hp)
    out = out.transpose(0, 2, 1, 3).reshape(B, S, num_heads * head_dim)
    return jnp.matmul(out, w_o.T, precision=hp)


if __name__ == "__main__":
    # Small shapes consistent with the module: hidden=32, 4 heads (head_dim=8),
    # 2 KV heads (GQA group=2), batch=2, seq=8.
    B, S = 2, 8
    hidden = 32
    num_heads = 4
    num_kv_heads = 2
    head_dim = hidden // num_heads
    base = 10000.0

    key = jax.random.PRNGKey(0)
    k1, k2, k3 = jax.random.split(key, 3)
    hidden_states = jax.random.normal(k1, (B, S, hidden), dtype=jnp.float32)
    op_size = num_heads * head_dim + 2 * (num_kv_heads * head_dim)
    w_qkv = 0.05 * jax.random.normal(k2, (op_size, hidden), dtype=jnp.float32)
    w_o = 0.05 * jax.random.normal(k3, (hidden, num_heads * head_dim),
                                   dtype=jnp.float32)

    position_ids = jnp.broadcast_to(
        jnp.arange(S, dtype=jnp.int32)[None, :], (B, S))
    # inv_freq = 1 / base ** (arange(0, dim, 2) / dim)
    inv_freq = 1.0 / (base ** (jnp.arange(0, head_dim, 2, dtype=jnp.float32)
                               / head_dim))

    # Additive causal mask (B, 1, S, S), as HF passes into the eager attention.
    row = jnp.arange(S)[:, None]
    col = jnp.arange(S)[None, :]
    causal = jnp.where(col <= row, 0.0, -1e30).astype(jnp.float32)
    attention_mask = jnp.broadcast_to(causal[None, None], (B, 1, S, S))

    out = phi3_attention(hidden_states, position_ids, attention_mask,
                         w_qkv, w_o, inv_freq, num_heads, num_kv_heads)
    out = jax.block_until_ready(out)

    ref = _reference(hidden_states, position_ids, attention_mask,
                     w_qkv, w_o, inv_freq, num_heads, num_kv_heads)

    assert out.shape == (B, S, hidden), out.shape
    assert out.dtype == hidden_states.dtype, out.dtype
    assert jnp.allclose(out, ref, atol=2e-3, rtol=2e-3), (
        float(jnp.max(jnp.abs(out - ref))))

    print("KERNEL_OK")
</pallas_src>

<mosaic_0001>
module attributes {stable_mosaic.version = 11 : i64} {
  func.func @_matmul_kernel(%arg0: i32, %arg1: i32, %arg2: i32, %arg3: memref<16x32xf32, #tpu.memory_space<vmem>>, %arg4: memref<32x64xf32, #tpu.memory_space<vmem>>, %arg5: memref<16x64xf32, #tpu.memory_space<vmem>>, %arg6: memref<16x64xf32, #tpu.memory_space<vmem>>) attributes {dimension_semantics = [#tpu.dimension_semantics<parallel>, #tpu.dimension_semantics<parallel>, #tpu.dimension_semantics<arbitrary>], iteration_bounds = array<i64: 1, 1, 1>, scalar_prefetch = 0 : i64, scratch_operands = 1 : i64, tpu.core_type = #tpu.core_type<tc>, window_params = [{transform_indices = @transform_0, window_bounds = array<i64: 16, 32>}, {transform_indices = @transform_1, window_bounds = array<i64: 32, 64>}, {transform_indices = @transform_2, window_bounds = array<i64: 16, 64>}]} {
    %c0_i32 = arith.constant 0 : i32
    %0 = arith.cmpi eq, %arg2, %c0_i32 : i32
    %1 = arith.extui %0 : i1 to i32
    %c0_i32_0 = arith.constant 0 : i32
    %2 = arith.cmpi ne, %1, %c0_i32_0 : i32
    scf.if %2 {
      %cst_10 = arith.constant 0.000000e+00 : f32
      %12 = vector.broadcast %cst_10 : f32 to vector<16x64xf32>
      %c0_11 = arith.constant 0 : index
      %c0_12 = arith.constant 0 : index
      %13 = vector.load %arg6[%c0_11, %c0_12] : memref<16x64xf32, #tpu.memory_space<vmem>>, vector<16x64xf32>
      tpu.vector_store %arg6[%c0_11, %c0_12], %12 {strides = array<i32>} : memref<16x64xf32, #tpu.memory_space<vmem>>, vector<16x64xf32>,
    } else {
    }
    %c0 = arith.constant 0 : index
    %c0_1 = arith.constant 0 : index
    %3 = vector.load %arg6[%c0, %c0_1] : memref<16x64xf32, #tpu.memory_space<vmem>>, vector<16x64xf32>
    %c0_2 = arith.constant 0 : index
    %c0_3 = arith.constant 0 : index
    %4 = vector.load %arg3[%c0_2, %c0_3] : memref<16x32xf32, #tpu.memory_space<vmem>>, vector<16x32xf32>
    %c0_4 = arith.constant 0 : index
    %c0_5 = arith.constant 0 : index
    %5 = vector.load %arg4[%c0_4, %c0_5] : memref<32x64xf32, #tpu.memory_space<vmem>>, vector<32x64xf32>
    %cst = arith.constant dense<0.000000e+00> : vector<16x64xf32>
    %6 = tpu.matmul %4, %5, %cst {dimension_numbers = #tpu.dot_dimension_numbers<[1], [0], [0], [1], [0, 0, 1, 1], [], []>} : vector<16x32xf32>, vector<32x64xf32>, vector<16x64xf32> -> vector<16x64xf32>
    %7 = arith.addf %3, %6 : vector<16x64xf32>
    %c0_6 = arith.constant 0 : index
    %c0_7 = arith.constant 0 : index
    %8 = vector.load %arg6[%c0_6, %c0_7] : memref<16x64xf32, #tpu.memory_space<vmem>>, vector<16x64xf32>
    tpu.vector_store %arg6[%c0_6, %c0_7], %7 {strides = array<i32>} : memref<16x64xf32, #tpu.memory_space<vmem>>, vector<16x64xf32>,
    %c0_i32_8 = arith.constant 0 : i32
    %9 = arith.cmpi eq, %arg2, %c0_i32_8 : i32
    %10 = arith.extui %9 : i1 to i32
    %c0_i32_9 = arith.constant 0 : i32
    %11 = arith.cmpi ne, %10, %c0_i32_9 : i32
    scf.if %11 {
      %c0_10 = arith.constant 0 : index
      %c0_11 = arith.constant 0 : index
      %12 = vector.load %arg6[%c0_10, %c0_11] : memref<16x64xf32, #tpu.memory_space<vmem>>, vector<16x64xf32>
      %c0_12 = arith.constant 0 : index
      %c0_13 = arith.constant 0 : index
      %13 = vector.load %arg5[%c0_12, %c0_13] : memref<16x64xf32, #tpu.memory_space<vmem>>, vector<16x64xf32>
      tpu.vector_store %arg5[%c0_12, %c0_13], %12 {strides = array<i32>} : memref<16x64xf32, #tpu.memory_space<vmem>>, vector<16x64xf32>,
    } else {
    }
    return
  }
  func.func @transform_0(%arg0: i32, %arg1: i32, %arg2: i32) -> (i32, i32) {
    %c0_i32 = arith.constant 0 : i32
    return %arg0, %arg2 : i32, i32
  }
  func.func @transform_1(%arg0: i32, %arg1: i32, %arg2: i32) -> (i32, i32) {
    %c0_i32 = arith.constant 0 : i32
    return %arg2, %arg1 : i32, i32
  }
  func.func @transform_2(%arg0: i32, %arg1: i32, %arg2: i32) -> (i32, i32) {
    %c0_i32 = arith.constant 0 : i32
    return %arg0, %arg1 : i32, i32
  }
}

</mosaic_0001>

<llo_original>
// kernel: tpu_custom_call.1
$region0: #{tpu_custom_call.1}
  #allocation0 [shape = 'u32[]', space=smem, size = 0x4, offset = 0x4, fixed_abs, tag = 'smem constant byte address 0x4 - core index']
  #allocation1 [shape = 'u32[144,128]{1,0:T(1,128)}', space=vmem, size = 0x12000, scoped, tag = 'internal scratch']
  #allocation2 [shape = 'f32[16,64]{1,0:T(8,128)}', space=vmem, size = 0x2000, scoped, tag = 'scratch operand']
  %s0 = inlined_call_operand.hbm [shape: f32[16,32], index: 0, kind: input, shape index: {}]
  %s1 = inlined_call_operand.hbm [shape: f32[32,64], index: 1, kind: input, shape index: {}]
  %s2 = inlined_call_operand.hbm [shape: f32[16,64], index: 2, kind: output, shape index: {}]
  %s3 = sld [smem:[#allocation0]]
  $region34: #{tpu_custom_call.1} parent=0
    _
  %s5 = ssub.s32 1, %s3
  %s6 = scalar_select 0, %s5, %s3
  $region1: #{tpu_custom_call.1} parent=0
    #allocation3 [shape = 'u8[8192]{0}', space=vmem, size = 0x2000, scoped, tag = 'input window, operand 0, single buffered']
    #allocation4 [shape = 's32[1]{0}', space=sflag, size = 0x4, scoped, tag = 'scoped memory for tpu_custom_call.1']
    #allocation5 [shape = 's32[1]{0}', space=sflag, size = 0x4, scoped, tag = 'scoped memory for tpu_custom_call.1']
    #allocation6 [shape = 'u8[16384]{0}', space=vmem, size = 0x4000, scoped, tag = 'input window, operand 1, single buffered']
    #allocation7 [shape = 's32[1]{0}', space=sflag, size = 0x4, scoped, tag = 'scoped memory for tpu_custom_call.1']
    #allocation8 [shape = 'u8[8192]{0}', space=vmem, size = 0x2000, scoped, tag = 'output window, operand 0, single buffered']
    %7 = vsyncpa [#allocation4], 0
    %8 = vsyncpa [#allocation7], 0
    %9 = vsyncpa [#allocation5], 0
    // Predicated region
    $region2: #{tpu_custom_call.1} parent=1 // pred_check
      _
    $region3: #{tpu_custom_call.1} parent=1 // pred_check_branch
      %11 = sbr.rel (0) target = $region5
    $region4: #{tpu_custom_call.1} parent=1 // pred_region
      %s13 = ssub.s32 256, 256
      %14 = vsyncadd [#allocation4], %s13
      %s15 = sshll.u32 [#allocation3], 4
      %s16 = int_to_ptr.vmem [resolvable:$true] %s15
      %21 = dma.hbm_to_vmem [thread:$0]  %s0, 256, %s16, [#allocation4], 128, 128, 8
    $region5: #{tpu_custom_call.1} parent=1 // pred_fallthru
      _
    // Predicated region
    $region6: #{tpu_custom_call.1} parent=1 // pred_check
      _
    $region7: #{tpu_custom_call.1} parent=1 // pred_check_branch
      %23 = sbr.rel (0) target = $region9
    $region8: #{tpu_custom_call.1} parent=1 // pred_region
      %s25 = ssub.s32 512, 512
      %26 = vsyncadd [#allocation7], %s25
      %s27 = sshll.u32 [#allocation6], 4
      %s28 = int_to_ptr.vmem [resolvable:$true] %s27
      %33 = dma.hbm_to_vmem [thread:$0]  %s1, 512, %s28, [#allocation7], 128, 128, 8
    $region9: #{tpu_custom_call.1} parent=1 // pred_fallthru
      _
    // Predicated region
    $region10: #{tpu_custom_call.1} parent=1 // pred_check
      _
    $region11: #{tpu_custom_call.1} parent=1 // pred_check_branch
      %35 = sbr.rel (0) target = $region13
    $region12: #{tpu_custom_call.1} parent=1 // pred_region
      %36 = dma.done [#allocation4], 256
    $region13: #{tpu_custom_call.1} parent=1 // pred_fallthru
      _
    // Predicated region
    $region14: #{tpu_custom_call.1} parent=1 // pred_check
      _
    $region15: #{tpu_custom_call.1} parent=1 // pred_check_branch
      %38 = sbr.rel (0) target = $region17
    $region16: #{tpu_custom_call.1} parent=1 // pred_region
      %39 = dma.done [#allocation7], 512
    $region17: #{tpu_custom_call.1} parent=1 // pred_fallthru
      _
    %p40 = scmp.eq.s32.totalorder 0, 0
    // Predicated region
    $region18: #{tpu_custom_call.1} parent=1 // pred_check
      %p41 = pneg %p40
    $region19: #{tpu_custom_call.1} parent=1 // pred_check_branch
      %43 = sbr.rel (%p41) target = $region21
    $region20: #{tpu_custom_call.1} parent=1 // pred_region
      %vm44 = vcmask 523264
      %45 = vst.msk [vmem:[#allocation2] sm:$0xff] %vm44, 0.0
      %46 = vst.msk [vmem:[#allocation2 + $0x8] sm:$0xff] %vm44, 0.0
    $region21: #{tpu_custom_call.1} parent=1 // pred_fallthru
      _
    %v47 = vld [vmem:[#allocation2] sm:$0xff]
    %v48 = vld [vmem:[#allocation2 + $0x8] sm:$0xff]
    %v49 = vld [vmem:[#allocation3] sm:$0xff]
    %v50 = vld [vmem:[#allocation3 + $0x8] sm:$0xff]
    %v51 = vld [vmem:[#allocation6] sm:$0xff]
    %v52 = vld [vmem:[#allocation6 + $0x8] sm:$0xff]
    %v53 = vld [vmem:[#allocation6 + $0x10] sm:$0xff]
    %v54 = vld [vmem:[#allocation6 + $0x18] sm:$0xff]
    %vm55 = vcmask 261120
    %v57 = vsel %vm55, %v49, 0
    %v60 = vsel %vm55, %v50, 0
    %62 = vmatprep.subr.mxu0 0.0
    %63 = vmatpush1.msra.mxu0 0.0
    %64 = vmatprep.subr.mxu0 0.0
    %65 = vmatpush1.msra.mxu0 0.0
    %66 = vmatprep.subr.mxu0 0.0
    %67 = vmatpush1.msra.mxu0 0.0
    %68 = vmatprep.subr.mxu0 0.0
    %69 = vmatpush1.msra.mxu0 0.0
    %70 = vmatprep.subr.mxu0 0.0
    %71 = vmatpush1.msra.mxu0 0.0
    %72 = vmatprep.subr.mxu0 0.0
    %73 = vmatpush1.msra.mxu0 0.0
    %74 = vmatprep.subr.mxu0 0.0
    %75 = vmatpush1.msra.mxu0 0.0
    %76 = vmatprep.subr.mxu0 0.0
    %77 = vmatpush1.msra.mxu0 0.0
    %78 = vmatprep.subr.mxu0 0.0
    %79 = vmatpush1.msra.mxu0 0.0
    %80 = vmatprep.subr.mxu0 0.0
    %81 = vmatpush1.msra.mxu0 0.0
    %82 = vmatprep.subr.mxu0 0.0
    %83 = vmatpush1.msra.mxu0 0.0
    %84 = vmatprep.subr.mxu0 0.0
    %85 = vmatpush1.msra.mxu0 0.0
    %86 = vmatprep.subr.mxu0 0.0
    %87 = vmatpush1.msra.mxu0 %v54
    %88 = vmatprep.subr.mxu0 0.0
    %89 = vmatpush1.msra.mxu0 %v53
    %90 = vmatprep.subr.mxu0 0.0
    %91 = vmatpush1.msra.mxu0 %v52
    %92 = vmatprep.subr.mxu0 0.0
    %93 = vmatpush1.msra.mxu0 %v51
    %94 = vmatprep.subr.mxu0 0.0
    %95 = vmatpush2.msra.mxu0 0.0
    %96 = vmatprep.subr.mxu0 0.0
    %97 = vmatpush2.msra.mxu0 0.0
    %98 = vmatprep.subr.mxu0 0.0
    %99 = vmatpush2.msra.mxu0 0.0
    %100 = vmatprep.subr.mxu0 0.0
    %101 = vmatpush2.msra.mxu0 0.0
    %102 = vmatprep.subr.mxu0 0.0
    %103 = vmatpush2.msra.mxu0 0.0
    %104 = vmatprep.subr.mxu0 0.0
    %105 = vmatpush2.msra.mxu0 0.0
    %106 = vmatprep.subr.mxu0 0.0
    %107 = vmatpush2.msra.mxu0 0.0
    %108 = vmatprep.subr.mxu0 0.0
    %109 = vmatpush2.msra.mxu0 0.0
    %110 = vmatprep.subr.mxu0 0.0
    %111 = vmatpush2.msra.mxu0 0.0
    %112 = vmatprep.subr.mxu0 0.0
    %113 = vmatpush2.msra.mxu0 0.0
    %114 = vmatprep.subr.mxu0 0.0
    %115 = vmatpush2.msra.mxu0 0.0
    %116 = vmatprep.subr.mxu0 0.0
    %117 = vmatpush2.msra.mxu0 0.0
    %118 = vmatprep.subr.mxu0 0.0
    %119 = vmatpush2.msra.mxu0 0.0
    %120 = vmatprep.subr.mxu0 0.0
    %121 = vmatpush2.msra.mxu0 0.0
    %122 = vmatprep.subr.mxu0 0.0
    %123 = vmatpush2.msra.mxu0 0.0
    %124 = vmatprep.subr.mxu0 0.0
    %125 = vmatpush2.msra.mxu0 0.0
    %126 = vmatprep.mubr.f32.mxu0 0.0
    %127 = vmatmul.mubr.f32.gmra.mxu0 %v57
    %v128 = vpop.f32.mrf.mxu0
    %v129 = vadd.f32 0.0, %v128
    %v130 = vpop.f32.mrf.mxu0
    %131 = vmatprep.mubr.f32.mxu0 0.0
    %132 = vmatmul.mubr.f32.gmra.mxu0 %v60
    %v133 = vpop.f32.mrf.mxu0
    %v134 = vadd.f32 0.0, %v133
    %v135 = vpop.f32.mrf.mxu0
    %136 = vdwg.mxu0
    %v137 = vadd.f32 %v47, %v129
    %v138 = vadd.f32 %v48, %v134
    %vm139 = vcmask 523264
    %140 = vst.msk [vmem:[#allocation2] sm:$0xff] %vm139, %v137
    %141 = vst.msk [vmem:[#allocation2 + $0x8] sm:$0xff] %vm139, %v138
    // Predicated region
    $region22: #{tpu_custom_call.1} parent=1 // pred_check
      %p142 = pneg %p40
    $region23: #{tpu_custom_call.1} parent=1 // pred_check_branch
      %144 = sbr.rel (%p142) target = $region25
    $region24: #{tpu_custom_call.1} parent=1 // pred_region
      %v145 = vld [vmem:[#allocation2] sm:$0xff]
      %v146 = vld [vmem:[#allocation2 + $0x8] sm:$0xff]
      %147 = vst.msk [vmem:[#allocation8] sm:$0xff] %vm139, %v145
      %148 = vst.msk [vmem:[#allocation8 + $0x8] sm:$0xff] %vm139, %v146
    $region25: #{tpu_custom_call.1} parent=1 // pred_fallthru
      _
    // Predicated region
    $region26: #{tpu_custom_call.1} parent=1 // pred_check
      _
    $region27: #{tpu_custom_call.1} parent=1 // pred_check_branch
      %150 = sbr.rel (0) target = $region29
    $region28: #{tpu_custom_call.1} parent=1 // pred_region
      %s152 = ssub.s32 256, 256
      %153 = vsyncadd [#allocation5], %s152
      %s154 = sshll.u32 [#allocation8], 4
      %s155 = int_to_ptr.vmem [resolvable:$true] %s154
      %160 = dma.vmem_to_hbm [thread:$0]  %s155, 256, %s2, [#allocation5], 128, 128, 8
    $region29: #{tpu_custom_call.1} parent=1 // pred_fallthru
      _
    // Predicated region
    $region30: #{tpu_custom_call.1} parent=1 // pred_check
      _
    $region31: #{tpu_custom_call.1} parent=1 // pred_check_branch
      %162 = sbr.rel (0) target = $region33
    $region32: #{tpu_custom_call.1} parent=1 // pred_region
      %163 = dma.done [#allocation5], 256
    $region33: #{tpu_custom_call.1} parent=1 // pred_fallthru
      _
    %164 = vsyncpa [#allocation4], 1
    %165 = vsyncpa [#allocation7], 1
    %166 = vsyncpa [#allocation5], 1

</llo_original>
